<compile_context>
chip_gen: v7x
topology: tpu7x:2x2x1
jax: 0.10.0
libtpu: 0.0.40
codegen_flags: <defaults>
</compile_context>

<pallas_src>
import functools
import math
from typing import NamedTuple

import jax
import jax.numpy as jnp
from jax.experimental import pallas as pl
from jax.experimental.pallas import tpu as pltpu


_BATCH_TILE = 1024       # rows per grid step when B is large (multiple of 8)

# Whether this Pallas build accepts pipeline_mode=pl.Buffered(1) on the
# grid-invariant weight BlockSpecs; flipped to False on first rejection.
_SINGLE_BUFFER_WEIGHTS = True


def _round_up(x, m):
    return (x + m - 1) // m * m


def _vmem_tile_bytes(rows, cols, dtype):
    """VMEM bytes of one (rows, cols) tile including (8, 128) layout padding."""
    return (_round_up(max(int(rows), 1), 8)
            * _round_up(max(int(cols), 1), 128)
            * jnp.dtype(dtype).itemsize)


class PreparedGRUParams(NamedTuple):
    m_dim: int
    hid_dim: int
    hp: int            # hid_dim rounded up to 128 (lane-dense gate blocks)
    w_h: jax.Array     # (H, 3*hp)  columns [Whh_r | Whh_z | Whh_n], each lane-padded
    w_m: jax.Array     # (M, 3*hp)  columns [Wih_r | Wih_z | Wih_n]
    b_x: jax.Array     # (1, 3*hp) f32  [b_ih_r+b_hh_r | b_ih_z+b_hh_z | b_ih_n]
    b_h: jax.Array     # (1, 3*hp) f32  [0 | 0 | b_hh_n]


def prepare_message_processor_params(w_ih, w_hh, b_ih, b_hh,
                                     weight_dtype=jnp.bfloat16):
    """One-time parameter prep (transpose / split / lane-pad / cast). NOT per step."""
    w_ih = jnp.asarray(w_ih, jnp.float32)   # (3H, M)  torch GRUCell weight_ih
    w_hh = jnp.asarray(w_hh, jnp.float32)   # (3H, H)  torch GRUCell weight_hh
    b_ih = jnp.asarray(b_ih, jnp.float32)   # (3H,)
    b_hh = jnp.asarray(b_hh, jnp.float32)   # (3H,)

    three_h, m_dim = w_ih.shape
    hid = three_h // 3
    hp = _round_up(hid, 128)
    pad = hp - hid

    def pad_cols(x):                        # (K, H) -> (K, hp); zero lanes never stored
        return jnp.pad(x, ((0, 0), (0, pad)))

    def pad_vec(v):                         # (H,) -> (hp,)
        return jnp.pad(v, (0, pad))

    wih_t = w_ih.T                          # (M, 3H) : torch gate order [r | z | n]
    whh_t = w_hh.T                          # (H, 3H)
    w_m = jnp.concatenate(
        [pad_cols(wih_t[:, g * hid:(g + 1) * hid]) for g in range(3)],
        axis=1).astype(weight_dtype)        # (M, 3hp)
    w_h = jnp.concatenate(
        [pad_cols(whh_t[:, g * hid:(g + 1) * hid]) for g in range(3)],
        axis=1).astype(weight_dtype)        # (H, 3hp)

    # Bias folding: r/z biases summed (b_ih + b_hh); n-gate keeps b_ih_n outside
    # and b_hh_n inside the r*(...) term (torch.nn.GRUCell semantics).
    b_x = jnp.concatenate([
        pad_vec(b_ih[0:hid] + b_hh[0:hid]),
        pad_vec(b_ih[hid:2 * hid] + b_hh[hid:2 * hid]),
        pad_vec(b_ih[2 * hid:3 * hid]),
    ]).reshape(1, 3 * hp)
    b_h = jnp.concatenate([
        jnp.zeros((2 * hp,), jnp.float32),
        pad_vec(b_hh[2 * hid:3 * hid]),
    ]).reshape(1, 3 * hp)

    return PreparedGRUParams(m_dim=m_dim, hid_dim=hid, hp=hp,
                             w_h=w_h, w_m=w_m, b_x=b_x, b_h=b_h)


# ---------------------------------------------------------------------------
# Kernels
# ---------------------------------------------------------------------------

def _gru_gates(gx, gh, h_f32, hp, hid):
    """Shared GRU epilogue. f32 gate math; padded gate lanes dropped before store."""
    rz = jax.nn.sigmoid(gx[:, :2 * hp] + gh[:, :2 * hp])
    r = rz[:, :hp]
    z = rz[:, hp:]
    n = jnp.tanh(gx[:, 2 * hp:] + r * gh[:, 2 * hp:])
    if hid != hp:                       # zero-padded gate lanes are never written out
        n = n[:, :hid]
        z = z[:, :hid]
    return n + z * (h_f32 - n)          # == (1 - z) * n + z * h


def _gru_msg_kernel(h_ref, m_ref, wh_ref, wm_ref, bx_ref, bh_ref, out_ref, *,
                    hp, hid):
    """GRU step with a real message: two narrow dots, no concat, no padding."""
    h = h_ref[...]
    gh = jnp.dot(h.astype(wh_ref.dtype), wh_ref[...],
                 preferred_element_type=jnp.float32) + bh_ref[...]
    gx = jnp.dot(m_ref[...].astype(wm_ref.dtype), wm_ref[...],
                 preferred_element_type=jnp.float32) + bx_ref[...]
    out = _gru_gates(gx, gh, h.astype(jnp.float32), hp, hid)
    out_ref[...] = out.astype(out_ref.dtype)


def _gru_blank_kernel(h_ref, wh_ref, bx_ref, bh_ref, out_ref, *, hp, hid):
    """GRU step with a blank (zero) message: gx degenerates to the constant bias."""
    h = h_ref[...]
    gh = jnp.dot(h.astype(wh_ref.dtype), wh_ref[...],
                 preferred_element_type=jnp.float32) + bh_ref[...]
    gx = bx_ref[...]                    # (1, 3hp) broadcasts over the batch tile
    out = _gru_gates(gx, gh, h.astype(jnp.float32), hp, hid)
    out_ref[...] = out.astype(out_ref.dtype)


# ---------------------------------------------------------------------------
# pallas_call wrapper (ragged batch tiling, parallel batch axis)
# ---------------------------------------------------------------------------

def _gru_call(kernel, batch_inputs, const_inputs, out_cols, out_dtype):
    global _SINGLE_BUFFER_WEIGHTS
    b = batch_inputs[0].shape[0]
    bt = b if b <= _BATCH_TILE else _BATCH_TILE
    grid = (pl.cdiv(b, bt),)

    # VMEM budget from actual tile sizes: double-buffered activations, weights
    # counted at 2x (safe even if single-buffering is unavailable), plus a
    # generous allowance for the f32 gate intermediates and slack.
    hp3 = const_inputs[0].shape[1]
    vmem = 0
    for x in batch_inputs:
        vmem += 2 * _vmem_tile_bytes(bt, x.shape[1], x.dtype)
    vmem += 2 * _vmem_tile_bytes(bt, out_cols, out_dtype)
    for x in const_inputs:
        vmem += 2 * _vmem_tile_bytes(x.shape[0], x.shape[1], x.dtype)
    vmem += 6 * _vmem_tile_bytes(bt, hp3, jnp.float32)       # gx / gh / gates
    vmem = int(min(_round_up(vmem + (2 << 20), 1 << 20), 96 << 20))

    def build(single_buffer_weights):
        in_specs = [pl.BlockSpec((bt, x.shape[1]), lambda i: (i, 0))
                    for x in batch_inputs]
        for x in const_inputs:
            if single_buffer_weights:
                # Grid-invariant block: no point double-buffering it.
                in_specs.append(pl.BlockSpec(x.shape, lambda i: (0, 0),
                                             pipeline_mode=pl.Buffered(1)))
            else:
                in_specs.append(pl.BlockSpec(x.shape, lambda i: (0, 0)))
        return pl.pallas_call(
            kernel,
            out_shape=jax.ShapeDtypeStruct((b, out_cols), out_dtype),
            grid=grid,
            in_specs=in_specs,
            out_specs=pl.BlockSpec((bt, out_cols), lambda i: (i, 0)),
            compiler_params=pltpu.CompilerParams(
                dimension_semantics=("parallel",),
                vmem_limit_bytes=vmem),
        )

    args = (*batch_inputs, *const_inputs)
    if _SINGLE_BUFFER_WEIGHTS:
        try:
            return build(True)(*args)
        except Exception:
            _SINGLE_BUFFER_WEIGHTS = False   # this build rejects pipeline_mode
    return build(False)(*args)


def message_processor_forward(m, h, use_message, prepared):
    """Equivalent of MessageProcessor.forward(m, h, use_message)."""
    b, hid = h.shape
    assert hid == prepared.hid_dim
    if use_message:
        assert m.shape == (b, prepared.m_dim)
        kern = functools.partial(_gru_msg_kernel, hp=prepared.hp, hid=hid)
        return _gru_call(kern, [h, m],
                         [prepared.w_h, prepared.w_m, prepared.b_x, prepared.b_h],
                         hid, h.dtype)
    # "Ignoring message, using blank instead..." — a zero message contributes
    # only its bias, so skip the m input and the W_ih matmul entirely.
    kern = functools.partial(_gru_blank_kernel, hp=prepared.hp, hid=hid)
    return _gru_call(kern, [h],
                     [prepared.w_h, prepared.b_x, prepared.b_h],
                     hid, h.dtype)


# ---------------------------------------------------------------------------
# Init + pure-JAX reference (torch.nn.GRUCell semantics)
# ---------------------------------------------------------------------------

def init_gru_params(key, m_dim, hid_dim, dtype=jnp.float32):
    # TODO(synk): reset_parameters_util_x is not defined in the source; using the
    # standard GRUCell uniform init U(-1/sqrt(H), 1/sqrt(H)) instead.
    stdv = 1.0 / math.sqrt(hid_dim)
    k1, k2, k3, k4 = jax.random.split(key, 4)
    w_ih = jax.random.uniform(k1, (3 * hid_dim, m_dim), dtype, -stdv, stdv)
    w_hh = jax.random.uniform(k2, (3 * hid_dim, hid_dim), dtype, -stdv, stdv)
    b_ih = jax.random.uniform(k3, (3 * hid_dim,), dtype, -stdv, stdv)
    b_hh = jax.random.uniform(k4, (3 * hid_dim,), dtype, -stdv, stdv)
    return w_ih, w_hh, b_ih, b_hh


def gru_reference(m, h, params):
    w_ih, w_hh, b_ih, b_hh = params
    H = h.shape[1]
    gx = m @ w_ih.T + b_ih
    gh = h @ w_hh.T + b_hh
    r = jax.nn.sigmoid(gx[:, :H] + gh[:, :H])
    z = jax.nn.sigmoid(gx[:, H:2 * H] + gh[:, H:2 * H])
    n = jnp.tanh(gx[:, 2 * H:] + r * gh[:, 2 * H:])
    return (1.0 - z) * n + z * h


if __name__ == "__main__":
    key = jax.random.PRNGKey(0)

    # --- module-scale shapes: B=2, m_dim=16, hid_dim=32 -----------------------
    B, M_DIM, HID_DIM = 2, 16, 32
    k_m, k_h, k_p = jax.random.split(key, 3)
    m = jax.random.normal(k_m, (B, M_DIM), jnp.float32)
    h = jax.random.normal(k_h, (B, HID_DIM), jnp.float32)
    params = init_gru_params(k_p, M_DIM, HID_DIM)
    ref_use = gru_reference(m, h, params)
    ref_blank = gru_reference(jnp.zeros_like(m), h, params)

    # f32-weight prep: exact-precision check against the GRUCell formula.
    prep32 = prepare_message_processor_params(*params, weight_dtype=jnp.float32)
    out_use = jax.block_until_ready(message_processor_forward(m, h, True, prep32))
    out_blank = jax.block_until_ready(message_processor_forward(m, h, False, prep32))
    assert out_use.shape == (B, HID_DIM)
    assert jnp.allclose(out_use, ref_use, atol=1e-5, rtol=1e-5)
    assert jnp.allclose(out_blank, ref_blank, atol=1e-5, rtol=1e-5)

    # bf16-weight prep (production fast path): loose sanity tolerance.
    prep16 = prepare_message_processor_params(*params, weight_dtype=jnp.bfloat16)
    out_use16 = jax.block_until_ready(message_processor_forward(m, h, True, prep16))
    out_blank16 = jax.block_until_ready(message_processor_forward(m, h, False, prep16))
    assert jnp.allclose(out_use16, ref_use, atol=1e-1, rtol=1e-1)
    assert jnp.allclose(out_blank16, ref_blank, atol=1e-1, rtol=1e-1)

    # --- hid_dim already a multiple of 128 (no gate-lane padding branch) ------
    B2, M2, H2 = 4, 8, 128
    k_m2, k_h2, k_p2 = jax.random.split(jax.random.PRNGKey(1), 3)
    m2 = jax.random.normal(k_m2, (B2, M2), jnp.float32)
    h2 = jax.random.normal(k_h2, (B2, H2), jnp.float32)
    params2 = init_gru_params(k_p2, M2, H2)
    prep2 = prepare_message_processor_params(*params2, weight_dtype=jnp.float32)
    out2 = jax.block_until_ready(message_processor_forward(m2, h2, True, prep2))
    assert jnp.allclose(out2, gru_reference(m2, h2, params2), atol=1e-5, rtol=1e-5)

    # --- large batch: multi-step parallel grid + ragged (write-masked) last tile
    B3 = 1300
    k_m3, k_h3 = jax.random.split(jax.random.PRNGKey(2), 2)
    m3 = jax.random.normal(k_m3, (B3, M_DIM), jnp.float32)
    h3 = jax.random.normal(k_h3, (B3, HID_DIM), jnp.float32)
    out3 = jax.block_until_ready(message_processor_forward(m3, h3, True, prep32))
    assert out3.shape == (B3, HID_DIM)
    assert jnp.allclose(out3, gru_reference(m3, h3, params), atol=1e-5, rtol=1e-5)
    out3b = jax.block_until_ready(message_processor_forward(m3, h3, False, prep32))
    assert jnp.allclose(out3b, gru_reference(jnp.zeros_like(m3), h3, params),
                        atol=1e-5, rtol=1e-5)

    print("KERNEL_OK")
</pallas_src>

<mosaic_0001>
module attributes {stable_mosaic.version = 11 : i64} {
  func.func @_gru_msg_kernel(%arg0: i32, %arg1: memref<2x32xf32, #tpu.memory_space<vmem>>, %arg2: memref<2x16xf32, #tpu.memory_space<vmem>>, %arg3: memref<32x384xf32, #tpu.memory_space<vmem>>, %arg4: memref<16x384xf32, #tpu.memory_space<vmem>>, %arg5: memref<1x384xf32, #tpu.memory_space<vmem>>, %arg6: memref<1x384xf32, #tpu.memory_space<vmem>>, %arg7: memref<2x32xf32, #tpu.memory_space<vmem>>) attributes {dimension_semantics = [#tpu.dimension_semantics<parallel>], iteration_bounds = array<i64: 1>, scalar_prefetch = 0 : i64, scratch_operands = 0 : i64, tpu.core_type = #tpu.core_type<tc>, window_params = [{transform_indices = @transform_0, window_bounds = array<i64: 2, 32>}, {transform_indices = @transform_1, window_bounds = array<i64: 2, 16>}, {pipeline_mode = #tpu.pipeline_mode<synchronous>, transform_indices = @transform_2, window_bounds = array<i64: 32, 384>}, {pipeline_mode = #tpu.pipeline_mode<synchronous>, transform_indices = @transform_3, window_bounds = array<i64: 16, 384>}, {pipeline_mode = #tpu.pipeline_mode<synchronous>, transform_indices = @transform_4, window_bounds = array<i64: 1, 384>}, {pipeline_mode = #tpu.pipeline_mode<synchronous>, transform_indices = @transform_5, window_bounds = array<i64: 1, 384>}, {transform_indices = @transform_6, window_bounds = array<i64: 2, 32>}]} {
    %c0 = arith.constant 0 : index
    %c0_0 = arith.constant 0 : index
    %0 = vector.load %arg1[%c0, %c0_0] : memref<2x32xf32, #tpu.memory_space<vmem>>, vector<2x32xf32>
    %c0_1 = arith.constant 0 : index
    %c0_2 = arith.constant 0 : index
    %1 = vector.load %arg3[%c0_1, %c0_2] : memref<32x384xf32, #tpu.memory_space<vmem>>, vector<32x384xf32>
    %cst = arith.constant dense<0.000000e+00> : vector<2x384xf32>
    %2 = tpu.matmul %0, %1, %cst {dimension_numbers = #tpu.dot_dimension_numbers<[1], [0], [0], [1], [0, 0, 1, 1], [], []>} : vector<2x32xf32>, vector<32x384xf32>, vector<2x384xf32> -> vector<2x384xf32>
    %c0_3 = arith.constant 0 : index
    %c0_4 = arith.constant 0 : index
    %3 = vector.load %arg6[%c0_3, %c0_4] : memref<1x384xf32, #tpu.memory_space<vmem>>, vector<1x384xf32>
    %4 = vector.broadcast %3 : vector<1x384xf32> to vector<2x384xf32>
    %5 = arith.addf %2, %4 : vector<2x384xf32>
    %c0_5 = arith.constant 0 : index
    %c0_6 = arith.constant 0 : index
    %6 = vector.load %arg2[%c0_5, %c0_6] : memref<2x16xf32, #tpu.memory_space<vmem>>, vector<2x16xf32>
    %c0_7 = arith.constant 0 : index
    %c0_8 = arith.constant 0 : index
    %7 = vector.load %arg4[%c0_7, %c0_8] : memref<16x384xf32, #tpu.memory_space<vmem>>, vector<16x384xf32>
    %cst_9 = arith.constant dense<0.000000e+00> : vector<2x384xf32>
    %8 = tpu.matmul %6, %7, %cst_9 {dimension_numbers = #tpu.dot_dimension_numbers<[1], [0], [0], [1], [0, 0, 1, 1], [], []>} : vector<2x16xf32>, vector<16x384xf32>, vector<2x384xf32> -> vector<2x384xf32>
    %c0_10 = arith.constant 0 : index
    %c0_11 = arith.constant 0 : index
    %9 = vector.load %arg5[%c0_10, %c0_11] : memref<1x384xf32, #tpu.memory_space<vmem>>, vector<1x384xf32>
    %10 = vector.broadcast %9 : vector<1x384xf32> to vector<2x384xf32>
    %11 = arith.addf %8, %10 : vector<2x384xf32>
    %12 = vector.extract_strided_slice %11 {offsets = [0, 0], sizes = [2, 256], strides = [1, 1]} : vector<2x384xf32> to vector<2x256xf32>
    %13 = vector.extract_strided_slice %5 {offsets = [0, 0], sizes = [2, 256], strides = [1, 1]} : vector<2x384xf32> to vector<2x256xf32>
    %14 = arith.addf %12, %13 : vector<2x256xf32>
    %15 = arith.negf %14 : vector<2x256xf32>
    %16 = math.exp %15 : vector<2x256xf32>
    %cst_12 = arith.constant 1.000000e+00 : f32
    %17 = vector.broadcast %cst_12 : f32 to vector<2x256xf32>
    %18 = arith.addf %17, %16 : vector<2x256xf32>
    %19 = arith.divf %17, %18 : vector<2x256xf32>
    %20 = vector.extract_strided_slice %19 {offsets = [0, 0], sizes = [2, 128], strides = [1, 1]} : vector<2x256xf32> to vector<2x128xf32>
    %21 = vector.extract_strided_slice %19 {offsets = [0, 128], sizes = [2, 128], strides = [1, 1]} : vector<2x256xf32> to vector<2x128xf32>
    %22 = vector.extract_strided_slice %11 {offsets = [0, 256], sizes = [2, 128], strides = [1, 1]} : vector<2x384xf32> to vector<2x128xf32>
    %23 = vector.extract_strided_slice %5 {offsets = [0, 256], sizes = [2, 128], strides = [1, 1]} : vector<2x384xf32> to vector<2x128xf32>
    %24 = arith.mulf %20, %23 : vector<2x128xf32>
    %25 = arith.addf %22, %24 : vector<2x128xf32>
    %26 = math.tanh %25 : vector<2x128xf32>
    %27 = vector.extract_strided_slice %26 {offsets = [0, 0], sizes = [2, 32], strides = [1, 1]} : vector<2x128xf32> to vector<2x32xf32>
    %28 = vector.extract_strided_slice %21 {offsets = [0, 0], sizes = [2, 32], strides = [1, 1]} : vector<2x128xf32> to vector<2x32xf32>
    %29 = arith.subf %0, %27 : vector<2x32xf32>
    %30 = arith.mulf %28, %29 : vector<2x32xf32>
    %31 = arith.addf %27, %30 : vector<2x32xf32>
    %c0_13 = arith.constant 0 : index
    %c0_14 = arith.constant 0 : index
    %32 = vector.load %arg7[%c0_13, %c0_14] : memref<2x32xf32, #tpu.memory_space<vmem>>, vector<2x32xf32>
    tpu.vector_store %arg7[%c0_13, %c0_14], %31 {strides = array<i32>} : memref<2x32xf32, #tpu.memory_space<vmem>>, vector<2x32xf32>,
    return
  }
  func.func @transform_0(%arg0: i32) -> (i32, i32) {
    %c0_i32 = arith.constant 0 : i32
    %c0_i32_0 = arith.constant 0 : i32
    return %arg0, %c0_i32 : i32, i32
  }
  func.func @transform_1(%arg0: i32) -> (i32, i32) {
    %c0_i32 = arith.constant 0 : i32
    %c0_i32_0 = arith.constant 0 : i32
    return %arg0, %c0_i32 : i32, i32
  }
  func.func @transform_2(%arg0: i32) -> (i32, i32) {
    %c0_i32 = arith.constant 0 : i32
    %c0_i32_0 = arith.constant 0 : i32
    %c0_i32_1 = arith.constant 0 : i32
    return %c0_i32, %c0_i32_0 : i32, i32
  }
  func.func @transform_3(%arg0: i32) -> (i32, i32) {
    %c0_i32 = arith.constant 0 : i32
    %c0_i32_0 = arith.constant 0 : i32
    %c0_i32_1 = arith.constant 0 : i32
    return %c0_i32, %c0_i32_0 : i32, i32
  }
  func.func @transform_4(%arg0: i32) -> (i32, i32) {
    %c0_i32 = arith.constant 0 : i32
    %c0_i32_0 = arith.constant 0 : i32
    %c0_i32_1 = arith.constant 0 : i32
    return %c0_i32, %c0_i32_0 : i32, i32
  }
  func.func @transform_5(%arg0: i32) -> (i32, i32) {
    %c0_i32 = arith.constant 0 : i32
    %c0_i32_0 = arith.constant 0 : i32
    %c0_i32_1 = arith.constant 0 : i32
    return %c0_i32, %c0_i32_0 : i32, i32
  }
  func.func @transform_6(%arg0: i32) -> (i32, i32) {
    %c0_i32 = arith.constant 0 : i32
    %c0_i32_0 = arith.constant 0 : i32
    return %arg0, %c0_i32 : i32, i32
  }
}

module attributes {stable_mosaic.version = 11 : i64} {
  func.func @_gru_msg_kernel(%arg0: i32, %arg1: memref<2x32xf32, #tpu.memory_space<vmem>>, %arg2: memref<2x16xf32, #tpu.memory_space<vmem>>, %arg3: memref<32x384xf32, #tpu.memory_space<vmem>>, %arg4: memref<16x384xf32, #tpu.memory_space<vmem>>, %arg5: memref<1x384xf32, #tpu.memory_space<vmem>>, %arg6: memref<1x384xf32, #tpu.memory_space<vmem>>, %arg7: memref<2x32xf32, #tpu.memory_space<vmem>>) attributes {dimension_semantics = [#tpu.dimension_semantics<parallel>], iteration_bounds = array<i64: 1>, scalar_prefetch = 0 : i64, scratch_operands = 0 : i64, tpu.core_type = #tpu.core_type<tc>, window_params = [{transform_indices = @transform_0, window_bounds = array<i64: 2, 32>}, {transform_indices = @transform_1, window_bounds = array<i64: 2, 16>}, {pipeline_mode = #tpu.pipeline_mode<synchronous>, transform_indices = @transform_2, window_bounds = array<i64: 32, 384>}, {pipeline_mode = #tpu.pipeline_mode<synchronous>, transform_indices = @transform_3, window_bounds = array<i64: 16, 384>}, {pipeline_mode = #tpu.pipeline_mode<synchronous>, transform_indices = @transform_4, window_bounds = array<i64: 1, 384>}, {pipeline_mode = #tpu.pipeline_mode<synchronous>, transform_indices = @transform_5, window_bounds = array<i64: 1, 384>}, {transform_indices = @transform_6, window_bounds = array<i64: 2, 32>}]} {
    %c0 = arith.constant 0 : index
    %c0_0 = arith.constant 0 : index
    %0 = vector.load %arg1[%c0, %c0_0] : memref<2x32xf32, #tpu.memory_space<vmem>>, vector<2x32xf32>
    %c0_1 = arith.constant 0 : index
    %c0_2 = arith.constant 0 : index
    %1 = vector.load %arg3[%c0_1, %c0_2] : memref<32x384xf32, #tpu.memory_space<vmem>>, vector<32x384xf32>
    %cst = arith.constant dense<0.000000e+00> : vector<2x384xf32>
    %2 = tpu.matmul %0, %1, %cst {dimension_numbers = #tpu.dot_dimension_numbers<[1], [0], [0], [1], [0, 0, 1, 1], [], []>} : vector<2x32xf32>, vector<32x384xf32>, vector<2x384xf32> -> vector<2x384xf32>
    %c0_3 = arith.constant 0 : index
    %c0_4 = arith.constant 0 : index
    %3 = vector.load %arg6[%c0_3, %c0_4] : memref<1x384xf32, #tpu.memory_space<vmem>>, vector<1x384xf32>
    %4 = vector.broadcast %3 : vector<1x384xf32> to vector<2x384xf32>
    %5 = arith.addf %2, %4 : vector<2x384xf32>
    %c0_5 = arith.constant 0 : index
    %c0_6 = arith.constant 0 : index
    %6 = vector.load %arg2[%c0_5, %c0_6] : memref<2x16xf32, #tpu.memory_space<vmem>>, vector<2x16xf32>
    %c0_7 = arith.constant 0 : index
    %c0_8 = arith.constant 0 : index
    %7 = vector.load %arg4[%c0_7, %c0_8] : memref<16x384xf32, #tpu.memory_space<vmem>>, vector<16x384xf32>
    %cst_9 = arith.constant dense<0.000000e+00> : vector<2x384xf32>
    %8 = tpu.matmul %6, %7, %cst_9 {dimension_numbers = #tpu.dot_dimension_numbers<[1], [0], [0], [1], [0, 0, 1, 1], [], []>} : vector<2x16xf32>, vector<16x384xf32>, vector<2x384xf32> -> vector<2x384xf32>
    %c0_10 = arith.constant 0 : index
    %c0_11 = arith.constant 0 : index
    %9 = vector.load %arg5[%c0_10, %c0_11] : memref<1x384xf32, #tpu.memory_space<vmem>>, vector<1x384xf32>
    %10 = vector.broadcast %9 : vector<1x384xf32> to vector<2x384xf32>
    %11 = arith.addf %8, %10 : vector<2x384xf32>
    %12 = vector.extract_strided_slice %11 {offsets = [0, 0], sizes = [2, 256], strides = [1, 1]} : vector<2x384xf32> to vector<2x256xf32>
    %13 = vector.extract_strided_slice %5 {offsets = [0, 0], sizes = [2, 256], strides = [1, 1]} : vector<2x384xf32> to vector<2x256xf32>
    %14 = arith.addf %12, %13 : vector<2x256xf32>
    %15 = arith.negf %14 : vector<2x256xf32>
    %16 = math.exp %15 : vector<2x256xf32>
    %cst_12 = arith.constant 1.000000e+00 : f32
    %17 = vector.broadcast %cst_12 : f32 to vector<2x256xf32>
    %18 = arith.addf %17, %16 : vector<2x256xf32>
    %19 = arith.divf %17, %18 : vector<2x256xf32>
    %20 = vector.extract_strided_slice %19 {offsets = [0, 0], sizes = [2, 128], strides = [1, 1]} : vector<2x256xf32> to vector<2x128xf32>
    %21 = vector.extract_strided_slice %19 {offsets = [0, 128], sizes = [2, 128], strides = [1, 1]} : vector<2x256xf32> to vector<2x128xf32>
    %22 = vector.extract_strided_slice %11 {offsets = [0, 256], sizes = [2, 128], strides = [1, 1]} : vector<2x384xf32> to vector<2x128xf32>
    %23 = vector.extract_strided_slice %5 {offsets = [0, 256], sizes = [2, 128], strides = [1, 1]} : vector<2x384xf32> to vector<2x128xf32>
    %24 = arith.mulf %20, %23 : vector<2x128xf32>
    %25 = arith.addf %22, %24 : vector<2x128xf32>
    %26 = math.tanh %25 : vector<2x128xf32>
    %27 = vector.extract_strided_slice %26 {offsets = [0, 0], sizes = [2, 32], strides = [1, 1]} : vector<2x128xf32> to vector<2x32xf32>
    %28 = vector.extract_strided_slice %21 {offsets = [0, 0], sizes = [2, 32], strides = [1, 1]} : vector<2x128xf32> to vector<2x32xf32>
    %29 = arith.subf %0, %27 : vector<2x32xf32>
    %30 = arith.mulf %28, %29 : vector<2x32xf32>
    %31 = arith.addf %27, %30 : vector<2x32xf32>
    %c0_13 = arith.constant 0 : index
    %c0_14 = arith.constant 0 : index
    %32 = vector.load %arg7[%c0_13, %c0_14] : memref<2x32xf32, #tpu.memory_space<vmem>>, vector<2x32xf32>
    tpu.vector_store %arg7[%c0_13, %c0_14], %31 {strides = array<i32>} : memref<2x32xf32, #tpu.memory_space<vmem>>, vector<2x32xf32>,
    return
  }
  func.func @transform_0(%arg0: i32) -> (i32, i32) {
    %c0_i32 = arith.constant 0 : i32
    %c0_i32_0 = arith.constant 0 : i32
    return %arg0, %c0_i32 : i32, i32
  }
  func.func @transform_1(%arg0: i32) -> (i32, i32) {
    %c0_i32 = arith.constant 0 : i32
    %c0_i32_0 = arith.constant 0 : i32
    return %arg0, %c0_i32 : i32, i32
  }
  func.func @transform_2(%arg0: i32) -> (i32, i32) {
    %c0_i32 = arith.constant 0 : i32
    %c0_i32_0 = arith.constant 0 : i32
    %c0_i32_1 = arith.constant 0 : i32
    return %c0_i32, %c0_i32_0 : i32, i32
  }
  func.func @transform_3(%arg0: i32) -> (i32, i32) {
    %c0_i32 = arith.constant 0 : i32
    %c0_i32_0 = arith.constant 0 : i32
    %c0_i32_1 = arith.constant 0 : i32
    return %c0_i32, %c0_i32_0 : i32, i32
  }
  func.func @transform_4(%arg0: i32) -> (i32, i32) {
    %c0_i32 = arith.constant 0 : i32
    %c0_i32_0 = arith.constant 0 : i32
    %c0_i32_1 = arith.constant 0 : i32
    return %c0_i32, %c0_i32_0 : i32, i32
  }
  func.func @transform_5(%arg0: i32) -> (i32, i32) {
    %c0_i32 = arith.constant 0 : i32
    %c0_i32_0 = arith.constant 0 : i32
    %c0_i32_1 = arith.constant 0 : i32
    return %c0_i32, %c0_i32_0 : i32, i32
  }
  func.func @transform_6(%arg0: i32) -> (i32, i32) {
    %c0_i32 = arith.constant 0 : i32
    %c0_i32_0 = arith.constant 0 : i32
    return %arg0, %c0_i32 : i32, i32
  }
}

</mosaic_0001>

<llo_original>
// kernel: tpu_custom_call.1
$region0: #{tpu_custom_call.1}
  #allocation0 [shape = 'u32[]', space=smem, size = 0x4, offset = 0x4, fixed_abs, tag = 'smem constant byte address 0x4 - core index']
  #allocation1 [shape = 'u32[144,128]{1,0:T(1,128)}', space=vmem, size = 0x12000, scoped, tag = 'internal scratch']
  %s0 = inlined_call_operand.hbm [shape: f32[2,32], index: 0, kind: input, shape index: {}]
  %s1 = inlined_call_operand.hbm [shape: f32[2,16], index: 1, kind: input, shape index: {}]
  %s2 = inlined_call_operand.hbm [shape: f32[32,384], index: 2, kind: input, shape index: {}]
  %s3 = inlined_call_operand.hbm [shape: f32[16,384], index: 3, kind: input, shape index: {}]
  %s4 = inlined_call_operand.vmem [shape: f32[1,384], index: 4, kind: input, shape index: {}]
  %s5 = inlined_call_operand.vmem [shape: f32[1,384], index: 5, kind: input, shape index: {}]
  %s6 = inlined_call_operand.hbm [shape: f32[2,32], index: 6, kind: output, shape index: {}]
  %s7 = sld [smem:[#allocation0]]
  $region50: #{tpu_custom_call.1} parent=0
    _
  %s9 = ssub.s32 1, %s7
  %s10 = scalar_select 0, %s9, %s7
  $region1: #{tpu_custom_call.1} parent=0
    #allocation2 [shape = 'u8[1024]{0}', space=vmem, size = 0x400, scoped, tag = 'input window, operand 0, single buffered']
    #allocation3 [shape = 's32[1]{0}', space=sflag, size = 0x4, scoped, tag = 'scoped memory for tpu_custom_call.1']
    #allocation4 [shape = 's32[1]{0}', space=sflag, size = 0x4, scoped, tag = 'scoped memory for tpu_custom_call.1']
    #allocation5 [shape = 'u8[1024]{0}', space=vmem, size = 0x400, scoped, tag = 'input window, operand 1, single buffered']
    #allocation6 [shape = 's32[1]{0}', space=sflag, size = 0x4, scoped, tag = 'scoped memory for tpu_custom_call.1']
    #allocation7 [shape = 'u8[49152]{0}', space=vmem, size = 0xc000, scoped, tag = 'input window, operand 2, single buffered']
    #allocation8 [shape = 'u8[24576]{0}', space=vmem, size = 0x6000, scoped, tag = 'input window, operand 3, single buffered']
    #allocation9 [shape = 's32[1]{0}', space=sflag, size = 0x4, scoped, tag = 'scoped memory for tpu_custom_call.1']
    #allocation10 [shape = 'u8[1024]{0}', space=vmem, size = 0x400, scoped, tag = 'output window, operand 0, single buffered']
    %11 = vsyncpa [#allocation3], 0
    %12 = vsyncpa [#allocation6], 0
    %13 = vsyncpa [#allocation9], 0
    %14 = vsyncpa [#allocation4], 0
    // Predicated region
    $region2: #{tpu_custom_call.1} parent=1 // pred_check
      _
    $region3: #{tpu_custom_call.1} parent=1 // pred_check_branch
      %16 = sbr.rel (0) target = $region5
    $region4: #{tpu_custom_call.1} parent=1 // pred_region
      %s18 = ssub.s32 32, 32
      %19 = vsyncadd [#allocation3], %s18
      %s21 = sshll.u32 [#allocation2], 4
      %s22 = int_to_ptr.vmem [resolvable:$true] %s21
      %24 = dma.hbm_to_vmem [thread:$0]  %s0, 32, %s22, [#allocation3]
    $region5: #{tpu_custom_call.1} parent=1 // pred_fallthru
      _
    // Predicated region
    $region6: #{tpu_custom_call.1} parent=1 // pred_check
      _
    $region7: #{tpu_custom_call.1} parent=1 // pred_check_branch
      %26 = sbr.rel (0) target = $region9
    $region8: #{tpu_custom_call.1} parent=1 // pred_region
      %s28 = ssub.s32 32, 32
      %29 = vsyncadd [#allocation6], %s28
      %s31 = sshll.u32 [#allocation5], 4
      %s32 = int_to_ptr.vmem [resolvable:$true] %s31
      %34 = dma.hbm_to_vmem [thread:$0]  %s1, 32, %s32, [#allocation6]
    $region9: #{tpu_custom_call.1} parent=1 // pred_fallthru
      _
    // Predicated region
    $region10: #{tpu_custom_call.1} parent=1 // pred_check
      _
    $region11: #{tpu_custom_call.1} parent=1 // pred_check_branch
      %36 = sbr.rel (0) target = $region13
    $region12: #{tpu_custom_call.1} parent=1 // pred_region
      %s38 = ssub.s32 1536, 1536
      %39 = vsyncadd [#allocation6], %s38
      %s40 = sshll.u32 [#allocation7], 4
      %s41 = int_to_ptr.vmem [resolvable:$true] %s40
      %46 = dma.hbm_to_vmem [thread:$0]  %s2, 1536, %s41, [#allocation6], 384, 384, 24
    $region13: #{tpu_custom_call.1} parent=1 // pred_fallthru
      _
    // Predicated region
    $region14: #{tpu_custom_call.1} parent=1 // pred_check
      _
    $region15: #{tpu_custom_call.1} parent=1 // pred_check_branch
      %48 = sbr.rel (0) target = $region17
    $region16: #{tpu_custom_call.1} parent=1 // pred_region
      %s50 = ssub.s32 768, 768
      %51 = vsyncadd [#allocation9], %s50
      %s52 = sshll.u32 [#allocation8], 4
      %s53 = int_to_ptr.vmem [resolvable:$true] %s52
      %58 = dma.hbm_to_vmem [thread:$0]  %s3, 768, %s53, [#allocation9], 384, 384, 24
    $region17: #{tpu_custom_call.1} parent=1 // pred_fallthru
      _
    // Predicated region
    $region18: #{tpu_custom_call.1} parent=1 // pred_check
      _
    $region19: #{tpu_custom_call.1} parent=1 // pred_check_branch
      %60 = sbr.rel (0) target = $region21
    $region20: #{tpu_custom_call.1} parent=1 // pred_region
      _
    $region21: #{tpu_custom_call.1} parent=1 // pred_fallthru
      _
    // Predicated region
    $region22: #{tpu_custom_call.1} parent=1 // pred_check
      _
    $region23: #{tpu_custom_call.1} parent=1 // pred_check_branch
      %62 = sbr.rel (0) target = $region25
    $region24: #{tpu_custom_call.1} parent=1 // pred_region
      _
    $region25: #{tpu_custom_call.1} parent=1 // pred_fallthru
      _
    // Predicated region
    $region26: #{tpu_custom_call.1} parent=1 // pred_check
      _
    $region27: #{tpu_custom_call.1} parent=1 // pred_check_branch
      %64 = sbr.rel (0) target = $region29
    $region28: #{tpu_custom_call.1} parent=1 // pred_region
      %65 = dma.done [#allocation3], 32
    $region29: #{tpu_custom_call.1} parent=1 // pred_fallthru
      _
    // Predicated region
    $region30: #{tpu_custom_call.1} parent=1 // pred_check
      _
    $region31: #{tpu_custom_call.1} parent=1 // pred_check_branch
      %67 = sbr.rel (0) target = $region33
    $region32: #{tpu_custom_call.1} parent=1 // pred_region
      %68 = dma.done [#allocation6], 32
    $region33: #{tpu_custom_call.1} parent=1 // pred_fallthru
      _
    // Predicated region
    $region34: #{tpu_custom_call.1} parent=1 // pred_check
      _
    $region35: #{tpu_custom_call.1} parent=1 // pred_check_branch
      %70 = sbr.rel (0) target = $region37
    $region36: #{tpu_custom_call.1} parent=1 // pred_region
      %71 = dma.done [#allocation6], 1536
    $region37: #{tpu_custom_call.1} parent=1 // pred_fallthru
      _
    // Predicated region
    $region38: #{tpu_custom_call.1} parent=1 // pred_check
      _
    $region39: #{tpu_custom_call.1} parent=1 // pred_check_branch
      %73 = sbr.rel (0) target = $region41
    $region40: #{tpu_custom_call.1} parent=1 // pred_region
      %74 = dma.done [#allocation9], 768
    $region41: #{tpu_custom_call.1} parent=1 // pred_fallthru
      _
    %v75 = vld [vmem:[#allocation2] sm:$0x3]
    %v76 = vld [vmem:[#allocation7] sm:$0xff]
    %v77 = vld [vmem:[#allocation7 + $0x8] sm:$0xff]
    %v78 = vld [vmem:[#allocation7 + $0x10] sm:$0xff]
    %v79 = vld [vmem:[#allocation7 + $0x18] sm:$0xff]
    %v80 = vld [vmem:[#allocation7 + $0x20] sm:$0xff]
    %v81 = vld [vmem:[#allocation7 + $0x28] sm:$0xff]
    %v82 = vld [vmem:[#allocation7 + $0x30] sm:$0xff]
    %v83 = vld [vmem:[#allocation7 + $0x38] sm:$0xff]
    %v84 = vld [vmem:[#allocation7 + $0x40] sm:$0xff]
    %v85 = vld [vmem:[#allocation7 + $0x48] sm:$0xff]
    %v86 = vld [vmem:[#allocation7 + $0x50] sm:$0xff]
    %v87 = vld [vmem:[#allocation7 + $0x58] sm:$0xff]
    %v88 = vld [vmem:[%s5] sm:$0x7]
    %v90 = vlaneseq
    %v91 = vshrl.u32 %v90, 7
    %v92 = vsub.s32 0, %v91
    %v93 = vrot.slane %v88, %v92
    %v94 = vlaneseq
    %v95 = vshrl.u32 %v94, 7
    %v96 = vsub.s32 1, %v95
    %v97 = vrot.slane %v88, %v96
    %v98 = vlaneseq
    %v99 = vshrl.u32 %v98, 7
    %v100 = vsub.s32 2, %v99
    %v101 = vrot.slane %v88, %v100
    %vm105 = vcmask 261120
    %v107 = vsel %vm105, %v75, 0
    %109 = vmatprep.subr.mxu0 %v77
    %110 = vmatpush1.msra.mxu0 %v76
    %111 = vmatprep.subr.mxu0 %v80
    %112 = vmatpush1.msra.mxu0 %v79
    %113 = vmatprep.subr.mxu0 %v83
    %114 = vmatpush1.msra.mxu0 %v82
    %115 = vmatprep.subr.mxu0 %v86
    %116 = vmatpush1.msra.mxu0 %v85
    %117 = vmatprep.subr.mxu0 0.0
    %118 = vmatpush1.msra.mxu0 0.0
    %119 = vmatprep.subr.mxu0 0.0
    %120 = vmatpush1.msra.mxu0 0.0
    %121 = vmatprep.subr.mxu0 0.0
    %122 = vmatpush1.msra.mxu0 0.0
    %123 = vmatprep.subr.mxu0 0.0
    %124 = vmatpush1.msra.mxu0 0.0
    %125 = vmatprep.subr.mxu0 0.0
    %126 = vmatpush1.msra.mxu0 0.0
    %127 = vmatprep.subr.mxu0 0.0
    %128 = vmatpush1.msra.mxu0 0.0
    %129 = vmatprep.subr.mxu0 0.0
    %130 = vmatpush1.msra.mxu0 0.0
    %131 = vmatprep.subr.mxu0 0.0
    %132 = vmatpush1.msra.mxu0 0.0
    %133 = vmatprep.subr.mxu0 0.0
    %134 = vmatpush1.msra.mxu0 0.0
    %135 = vmatprep.subr.mxu0 0.0
    %136 = vmatpush1.msra.mxu0 0.0
    %137 = vmatprep.subr.mxu0 0.0
    %138 = vmatpush1.msra.mxu0 0.0
    %139 = vmatprep.subr.mxu0 0.0
    %140 = vmatpush1.msra.mxu0 0.0
    %141 = vmatprep.subr.mxu0 0.0
    %142 = vmatpush1.msra.mxu0 0.0
    %143 = vmatprep.subr.mxu0 0.0
    %144 = vmatpush1.msra.mxu0 0.0
    %145 = vmatprep.subr.mxu0 0.0
    %146 = vmatpush1.msra.mxu0 0.0
    %147 = vmatprep.subr.mxu0 0.0
    %148 = vmatpush1.msra.mxu0 0.0
    %149 = vmatprep.subr.mxu0 0.0
    %150 = vmatpush1.msra.mxu0 0.0
    %151 = vmatprep.subr.mxu0 0.0
    %152 = vmatpush1.msra.mxu0 0.0
    %153 = vmatprep.subr.mxu0 0.0
    %154 = vmatpush1.msra.mxu0 0.0
    %155 = vmatprep.subr.mxu0 0.0
    %156 = vmatpush1.msra.mxu0 0.0
    %157 = vmatprep.subr.mxu0 0.0
    %158 = vmatpush1.msra.mxu0 0.0
    %159 = vmatprep.subr.mxu0 0.0
    %160 = vmatpush1.msra.mxu0 0.0
    %161 = vmatprep.subr.mxu0 0.0
    %162 = vmatpush1.msra.mxu0 0.0
    %163 = vmatprep.subr.mxu0 0.0
    %164 = vmatpush1.msra.mxu0 0.0
    %165 = vmatprep.subr.mxu0 0.0
    %166 = vmatpush1.msra.mxu0 0.0
    %167 = vmatprep.subr.mxu0 0.0
    %168 = vmatpush1.msra.mxu0 0.0
    %169 = vmatprep.subr.mxu0 0.0
    %170 = vmatpush1.msra.mxu0 0.0
    %171 = vmatprep.subr.mxu0 0.0
    %172 = vmatpush1.msra.mxu0 0.0
    %173 = vmatprep.mubr.f32.mxu0 0.0
    %174 = vmatmul.mubr.f32.gmra.mrb[0].mxu0 %v107
    %v175 = vpop.f32.mrb[0].mxu0
    %v176 = vadd.f32 %v93, %v175
    %v177 = vpop.f32.mrb[0].mxu0
    %v178 = vadd.f32 %v97, %v177
    %179 = vdwg.mxu0
    %180 = vmatprep.subr.mxu0 0.0
    %181 = vmatpush1.msra.mxu0 %v78
    %182 = vmatprep.subr.mxu0 0.0
    %183 = vmatpush1.msra.mxu0 %v81
    %184 = vmatprep.subr.mxu0 0.0
    %185 = vmatpush1.msra.mxu0 %v84
    %186 = vmatprep.subr.mxu0 0.0
    %187 = vmatpush1.msra.mxu0 %v87
    %188 = vmatprep.subr.mxu0 0.0
    %189 = vmatpush1.msra.mxu0 0.0
    %190 = vmatprep.subr.mxu0 0.0
    %191 = vmatpush1.msra.mxu0 0.0
    %192 = vmatprep.subr.mxu0 0.0
    %193 = vmatpush1.msra.mxu0 0.0
    %194 = vmatprep.subr.mxu0 0.0
    %195 = vmatpush1.msra.mxu0 0.0
    %196 = vmatprep.subr.mxu0 0.0
    %197 = vmatpush1.msra.mxu0 0.0
    %198 = vmatprep.subr.mxu0 0.0
    %199 = vmatpush1.msra.mxu0 0.0
    %200 = vmatprep.subr.mxu0 0.0
    %201 = vmatpush1.msra.mxu0 0.0
    %202 = vmatprep.subr.mxu0 0.0
    %203 = vmatpush1.msra.mxu0 0.0
    %204 = vmatprep.subr.mxu0 0.0
    %205 = vmatpush1.msra.mxu0 0.0
    %206 = vmatprep.subr.mxu0 0.0
    %207 = vmatpush1.msra.mxu0 0.0
    %208 = vmatprep.subr.mxu0 0.0
    %209 = vmatpush1.msra.mxu0 0.0
    %210 = vmatprep.subr.mxu0 0.0
    %211 = vmatpush1.msra.mxu0 0.0
    %212 = vmatprep.subr.mxu0 0.0
    %213 = vmatpush1.msra.mxu0 0.0
    %214 = vmatprep.subr.mxu0 0.0
    %215 = vmatpush1.msra.mxu0 0.0
    %216 = vmatprep.subr.mxu0 0.0
    %217 = vmatpush1.msra.mxu0 0.0
    %218 = vmatprep.subr.mxu0 0.0
    %219 = vmatpush1.msra.mxu0 0.0
    %220 = vmatprep.subr.mxu0 0.0
    %221 = vmatpush1.msra.mxu0 0.0
    %222 = vmatprep.subr.mxu0 0.0
    %223 = vmatpush1.msra.mxu0 0.0
    %224 = vmatprep.subr.mxu0 0.0
    %225 = vmatpush1.msra.mxu0 0.0
    %226 = vmatprep.subr.mxu0 0.0
    %227 = vmatpush1.msra.mxu0 0.0
    %228 = vmatprep.subr.mxu0 0.0
    %229 = vmatpush1.msra.mxu0 0.0
    %230 = vmatprep.subr.mxu0 0.0
    %231 = vmatpush1.msra.mxu0 0.0
    %232 = vmatprep.subr.mxu0 0.0
    %233 = vmatpush1.msra.mxu0 0.0
    %234 = vmatprep.subr.mxu0 0.0
    %235 = vmatpush1.msra.mxu0 0.0
    %236 = vmatprep.subr.mxu0 0.0
    %237 = vmatpush1.msra.mxu0 0.0
    %238 = vmatprep.subr.mxu0 0.0
    %239 = vmatpush1.msra.mxu0 0.0
    %240 = vmatprep.subr.mxu0 0.0
    %241 = vmatpush1.msra.mxu0 0.0
    %242 = vmatprep.subr.mxu0 0.0
    %243 = vmatpush1.msra.mxu0 0.0
    %244 = vmatprep.mubr.f32.mxu0 0.0
    %245 = vmatmul.mubr.f32.gmra.mrb[0].mxu0 %v107
    %v246 = vpop.f32.mrb[0].mxu0
    %v247 = vadd.f32 %v101, %v246
    %v248 = vpop.f32.mrb[0].mxu0
    %249 = vdwg.mxu0
    %v250 = vld [vmem:[#allocation5] sm:$0x3]
    %v251 = vld [vmem:[#allocation8] sm:$0xff]
    %v252 = vld [vmem:[#allocation8 + $0x8] sm:$0xff]
    %v253 = vld [vmem:[#allocation8 + $0x10] sm:$0xff]
    %v254 = vld [vmem:[#allocation8 + $0x18] sm:$0xff]
    %v255 = vld [vmem:[#allocation8 + $0x20] sm:$0xff]
    %v256 = vld [vmem:[#allocation8 + $0x28] sm:$0xff]
    %v257 = vld [vmem:[%s4] sm:$0x7]
    %v259 = vlaneseq
    %v260 = vshrl.u32 %v259, 7
    %v261 = vsub.s32 0, %v260
    %v262 = vrot.slane %v257, %v261
    %v263 = vlaneseq
    %v264 = vshrl.u32 %v263, 7
    %v265 = vsub.s32 1, %v264
    %v266 = vrot.slane %v257, %v265
    %v267 = vlaneseq
    %v268 = vshrl.u32 %v267, 7
    %v269 = vsub.s32 2, %v268
    %v270 = vrot.slane %v257, %v269
    %vm274 = vcmask 130048
    %v276 = vsel %vm274, %v250, 0
    %278 = vmatprep.subr.mxu0 %v252
    %279 = vmatpush1.msra.mxu0 %v251
    %280 = vmatprep.subr.mxu0 %v255
    %281 = vmatpush1.msra.mxu0 %v254
    %282 = vmatprep.subr.mxu0 0.0
    %283 = vmatpush1.msra.mxu0 0.0
    %284 = vmatprep.subr.mxu0 0.0
    %285 = vmatpush1.msra.mxu0 0.0
    %286 = vmatprep.subr.mxu0 0.0
    %287 = vmatpush1.msra.mxu0 0.0
    %288 = vmatprep.subr.mxu0 0.0
    %289 = vmatpush1.msra.mxu0 0.0
    %290 = vmatprep.subr.mxu0 0.0
    %291 = vmatpush1.msra.mxu0 0.0
    %292 = vmatprep.subr.mxu0 0.0
    %293 = vmatpush1.msra.mxu0 0.0
    %294 = vmatprep.subr.mxu0 0.0
    %295 = vmatpush1.msra.mxu0 0.0
    %296 = vmatprep.subr.mxu0 0.0
    %297 = vmatpush1.msra.mxu0 0.0
    %298 = vmatprep.subr.mxu0 0.0
    %299 = vmatpush1.msra.mxu0 0.0
    %300 = vmatprep.subr.mxu0 0.0
    %301 = vmatpush1.msra.mxu0 0.0
    %302 = vmatprep.subr.mxu0 0.0
    %303 = vmatpush1.msra.mxu0 0.0
    %304 = vmatprep.subr.mxu0 0.0
    %305 = vmatpush1.msra.mxu0 0.0
    %306 = vmatprep.subr.mxu0 0.0
    %307 = vmatpush1.msra.mxu0 0.0
    %308 = vmatprep.subr.mxu0 0.0
    %309 = vmatpush1.msra.mxu0 0.0
    %310 = vmatprep.subr.mxu0 0.0
    %311 = vmatpush1.msra.mxu0 0.0
    %312 = vmatprep.subr.mxu0 0.0
    %313 = vmatpush1.msra.mxu0 0.0
    %314 = vmatprep.subr.mxu0 0.0
    %315 = vmatpush1.msra.mxu0 0.0
    %316 = vmatprep.subr.mxu0 0.0
    %317 = vmatpush1.msra.mxu0 0.0
    %318 = vmatprep.subr.mxu0 0.0
    %319 = vmatpush1.msra.mxu0 0.0
    %320 = vmatprep.subr.mxu0 0.0
    %321 = vmatpush1.msra.mxu0 0.0
    %322 = vmatprep.subr.mxu0 0.0
    %323 = vmatpush1.msra.mxu0 0.0
    %324 = vmatprep.subr.mxu0 0.0
    %325 = vmatpush1.msra.mxu0 0.0
    %326 = vmatprep.subr.mxu0 0.0
    %327 = vmatpush1.msra.mxu0 0.0
    %328 = vmatprep.subr.mxu0 0.0
    %329 = vmatpush1.msra.mxu0 0.0
    %330 = vmatprep.subr.mxu0 0.0
    %331 = vmatpush1.msra.mxu0 0.0
    %332 = vmatprep.subr.mxu0 0.0
    %333 = vmatpush1.msra.mxu0 0.0
    %334 = vmatprep.subr.mxu0 0.0
    %335 = vmatpush1.msra.mxu0 0.0
    %336 = vmatprep.subr.mxu0 0.0
    %337 = vmatpush1.msra.mxu0 0.0
    %338 = vmatprep.subr.mxu0 0.0
    %339 = vmatpush1.msra.mxu0 0.0
    %340 = vmatprep.subr.mxu0 0.0
    %341 = vmatpush1.msra.mxu0 0.0
    %342 = vmatprep.mubr.f32.mxu0 0.0
    %343 = vmatmul.mubr.f32.gmra.mrb[0].mxu0 %v276
    %v344 = vpop.f32.mrb[0].mxu0
    %v345 = vadd.f32 %v262, %v344
    %v346 = vpop.f32.mrb[0].mxu0
    %v347 = vadd.f32 %v266, %v346
    %348 = vdwg.mxu0
    %349 = vmatprep.subr.mxu0 0.0
    %350 = vmatpush1.msra.mxu0 %v253
    %351 = vmatprep.subr.mxu0 0.0
    %352 = vmatpush1.msra.mxu0 %v256
    %353 = vmatprep.subr.mxu0 0.0
    %354 = vmatpush1.msra.mxu0 0.0
    %355 = vmatprep.subr.mxu0 0.0
    %356 = vmatpush1.msra.mxu0 0.0
    %357 = vmatprep.subr.mxu0 0.0
    %358 = vmatpush1.msra.mxu0 0.0
    %359 = vmatprep.subr.mxu0 0.0
    %360 = vmatpush1.msra.mxu0 0.0
    %361 = vmatprep.subr.mxu0 0.0
    %362 = vmatpush1.msra.mxu0 0.0
    %363 = vmatprep.subr.mxu0 0.0
    %364 = vmatpush1.msra.mxu0 0.0
    %365 = vmatprep.subr.mxu0 0.0
    %366 = vmatpush1.msra.mxu0 0.0
    %367 = vmatprep.subr.mxu0 0.0
    %368 = vmatpush1.msra.mxu0 0.0
    %369 = vmatprep.subr.mxu0 0.0
    %370 = vmatpush1.msra.mxu0 0.0
    %371 = vmatprep.subr.mxu0 0.0
    %372 = vmatpush1.msra.mxu0 0.0
    %373 = vmatprep.subr.mxu0 0.0
    %374 = vmatpush1.msra.mxu0 0.0
    %375 = vmatprep.subr.mxu0 0.0
    %376 = vmatpush1.msra.mxu0 0.0
    %377 = vmatprep.subr.mxu0 0.0
    %378 = vmatpush1.msra.mxu0 0.0
    %379 = vmatprep.subr.mxu0 0.0
    %380 = vmatpush1.msra.mxu0 0.0
    %381 = vmatprep.subr.mxu0 0.0
    %382 = vmatpush1.msra.mxu0 0.0
    %383 = vmatprep.subr.mxu0 0.0
    %384 = vmatpush1.msra.mxu0 0.0
    %385 = vmatprep.subr.mxu0 0.0
    %386 = vmatpush1.msra.mxu0 0.0
    %387 = vmatprep.subr.mxu0 0.0
    %388 = vmatpush1.msra.mxu0 0.0
    %389 = vmatprep.subr.mxu0 0.0
    %390 = vmatpush1.msra.mxu0 0.0
    %391 = vmatprep.subr.mxu0 0.0
    %392 = vmatpush1.msra.mxu0 0.0
    %393 = vmatprep.subr.mxu0 0.0
    %394 = vmatpush1.msra.mxu0 0.0
    %395 = vmatprep.subr.mxu0 0.0
    %396 = vmatpush1.msra.mxu0 0.0
    %397 = vmatprep.subr.mxu0 0.0
    %398 = vmatpush1.msra.mxu0 0.0
    %399 = vmatprep.subr.mxu0 0.0
    %400 = vmatpush1.msra.mxu0 0.0
    %401 = vmatprep.subr.mxu0 0.0
    %402 = vmatpush1.msra.mxu0 0.0
    %403 = vmatprep.subr.mxu0 0.0
    %404 = vmatpush1.msra.mxu0 0.0
    %405 = vmatprep.subr.mxu0 0.0
    %406 = vmatpush1.msra.mxu0 0.0
    %407 = vmatprep.subr.mxu0 0.0
    %408 = vmatpush1.msra.mxu0 0.0
    %409 = vmatprep.subr.mxu0 0.0
    %410 = vmatpush1.msra.mxu0 0.0
    %411 = vmatprep.subr.mxu0 0.0
    %412 = vmatpush1.msra.mxu0 0.0
    %413 = vmatprep.mubr.f32.mxu0 0.0
    %414 = vmatmul.mubr.f32.gmra.mrb[0].mxu0 %v276
    %v415 = vpop.f32.mrb[0].mxu0
    %v416 = vadd.f32 %v270, %v415
    %v417 = vpop.f32.mrb[0].mxu0
    %418 = vdwg.mxu0
    %v419 = vadd.f32 %v345, %v176
    %v420 = vadd.f32 %v347, %v178
    %v421 = vxor.u32 %v419, 2147483648
    %v422 = vxor.u32 %v420, 2147483648
    %v423 = vmul.f32 %v421, 1.442695
    %v424 = vpow.pop %v423
    %v425 = vmul.f32 %v422, 1.442695
    %v426 = vpow.pop %v425
    %v427 = vadd.f32 %v424, 1.0
    %v428 = vadd.f32 %v426, 1.0
    %v429 = vrcp.pop %v427
    %v430 = vmul.f32 1.0, %v429
    %v431 = vrcp.pop %v428
    %v432 = vmul.f32 1.0, %v431
    %v433 = vmul.f32 %v430, %v247
    %v434 = vadd.f32 %v416, %v433
    %v435 = vtanh.pop %v434
    %v436 = vsub.f32 %v75, %v435
    %v437 = vmul.f32 %v432, %v436
    %v438 = vadd.f32 %v435, %v437
    %vm439 = vcmask 254976
    %440 = vst.msk [vmem:[#allocation10] sm:$0x3] %vm439, %v438
    // Predicated region
    $region42: #{tpu_custom_call.1} parent=1 // pred_check
      _
    $region43: #{tpu_custom_call.1} parent=1 // pred_check_branch
      %442 = sbr.rel (0) target = $region45
    $region44: #{tpu_custom_call.1} parent=1 // pred_region
      %s444 = ssub.s32 32, 32
      %445 = vsyncadd [#allocation4], %s444
      %s447 = sshll.u32 [#allocation10], 4
      %s448 = int_to_ptr.vmem [resolvable:$true] %s447
      %450 = dma.vmem_to_hbm [thread:$0]  %s448, 32, %s6, [#allocation4]
    $region45: #{tpu_custom_call.1} parent=1 // pred_fallthru
      _
    // Predicated region
    $region46: #{tpu_custom_call.1} parent=1 // pred_check
      _
    $region47: #{tpu_custom_call.1} parent=1 // pred_check_branch
      %452 = sbr.rel (0) target = $region49
    $region48: #{tpu_custom_call.1} parent=1 // pred_region
      %453 = dma.done [#allocation4], 32
    $region49: #{tpu_custom_call.1} parent=1 // pred_fallthru
      _
    %454 = vsyncpa [#allocation3], 1
    %455 = vsyncpa [#allocation6], 1
    %456 = vsyncpa [#allocation9], 1
    %457 = vsyncpa [#allocation4], 1

// kernel: tpu_custom_call.1
$region0: #{tpu_custom_call.1}
  #allocation0 [shape = 'u32[]', space=smem, size = 0x4, offset = 0x4, fixed_abs, tag = 'smem constant byte address 0x4 - core index']
  #allocation1 [shape = 'u32[144,128]{1,0:T(1,128)}', space=vmem, size = 0x12000, scoped, tag = 'internal scratch']
  %s0 = inlined_call_operand.hbm [shape: f32[2,32], index: 0, kind: input, shape index: {}]
  %s1 = inlined_call_operand.hbm [shape: f32[2,16], index: 1, kind: input, shape index: {}]
  %s2 = inlined_call_operand.hbm [shape: f32[32,384], index: 2, kind: input, shape index: {}]
  %s3 = inlined_call_operand.hbm [shape: f32[16,384], index: 3, kind: input, shape index: {}]
  %s4 = inlined_call_operand.vmem [shape: f32[1,384], index: 4, kind: input, shape index: {}]
  %s5 = inlined_call_operand.vmem [shape: f32[1,384], index: 5, kind: input, shape index: {}]
  %s6 = inlined_call_operand.hbm [shape: f32[2,32], index: 6, kind: output, shape index: {}]
  %s7 = sld [smem:[#allocation0]]
  $region50: #{tpu_custom_call.1} parent=0
    _
  %s9 = ssub.s32 1, %s7
  %s10 = scalar_select 0, %s9, %s7
  $region1: #{tpu_custom_call.1} parent=0
    #allocation2 [shape = 'u8[1024]{0}', space=vmem, size = 0x400, scoped, tag = 'input window, operand 0, single buffered']
    #allocation3 [shape = 's32[1]{0}', space=sflag, size = 0x4, scoped, tag = 'scoped memory for tpu_custom_call.1']
    #allocation4 [shape = 's32[1]{0}', space=sflag, size = 0x4, scoped, tag = 'scoped memory for tpu_custom_call.1']
    #allocation5 [shape = 'u8[1024]{0}', space=vmem, size = 0x400, scoped, tag = 'input window, operand 1, single buffered']
    #allocation6 [shape = 's32[1]{0}', space=sflag, size = 0x4, scoped, tag = 'scoped memory for tpu_custom_call.1']
    #allocation7 [shape = 'u8[49152]{0}', space=vmem, size = 0xc000, scoped, tag = 'input window, operand 2, single buffered']
    #allocation8 [shape = 'u8[24576]{0}', space=vmem, size = 0x6000, scoped, tag = 'input window, operand 3, single buffered']
    #allocation9 [shape = 's32[1]{0}', space=sflag, size = 0x4, scoped, tag = 'scoped memory for tpu_custom_call.1']
    #allocation10 [shape = 'u8[1024]{0}', space=vmem, size = 0x400, scoped, tag = 'output window, operand 0, single buffered']
    %11 = vsyncpa [#allocation3], 0
    %12 = vsyncpa [#allocation6], 0
    %13 = vsyncpa [#allocation9], 0
    %14 = vsyncpa [#allocation4], 0
    // Predicated region
    $region2: #{tpu_custom_call.1} parent=1 // pred_check
      _
    $region3: #{tpu_custom_call.1} parent=1 // pred_check_branch
      %16 = sbr.rel (0) target = $region5
    $region4: #{tpu_custom_call.1} parent=1 // pred_region
      %s18 = ssub.s32 32, 32
      %19 = vsyncadd [#allocation3], %s18
      %s21 = sshll.u32 [#allocation2], 4
      %s22 = int_to_ptr.vmem [resolvable:$true] %s21
      %24 = dma.hbm_to_vmem [thread:$0]  %s0, 32, %s22, [#allocation3]
    $region5: #{tpu_custom_call.1} parent=1 // pred_fallthru
      _
    // Predicated region
    $region6: #{tpu_custom_call.1} parent=1 // pred_check
      _
    $region7: #{tpu_custom_call.1} parent=1 // pred_check_branch
      %26 = sbr.rel (0) target = $region9
    $region8: #{tpu_custom_call.1} parent=1 // pred_region
      %s28 = ssub.s32 32, 32
      %29 = vsyncadd [#allocation6], %s28
      %s31 = sshll.u32 [#allocation5], 4
      %s32 = int_to_ptr.vmem [resolvable:$true] %s31
      %34 = dma.hbm_to_vmem [thread:$0]  %s1, 32, %s32, [#allocation6]
    $region9: #{tpu_custom_call.1} parent=1 // pred_fallthru
      _
    // Predicated region
    $region10: #{tpu_custom_call.1} parent=1 // pred_check
      _
    $region11: #{tpu_custom_call.1} parent=1 // pred_check_branch
      %36 = sbr.rel (0) target = $region13
    $region12: #{tpu_custom_call.1} parent=1 // pred_region
      %s38 = ssub.s32 1536, 1536
      %39 = vsyncadd [#allocation6], %s38
      %s40 = sshll.u32 [#allocation7], 4
      %s41 = int_to_ptr.vmem [resolvable:$true] %s40
      %46 = dma.hbm_to_vmem [thread:$0]  %s2, 1536, %s41, [#allocation6], 384, 384, 24
    $region13: #{tpu_custom_call.1} parent=1 // pred_fallthru
      _
    // Predicated region
    $region14: #{tpu_custom_call.1} parent=1 // pred_check
      _
    $region15: #{tpu_custom_call.1} parent=1 // pred_check_branch
      %48 = sbr.rel (0) target = $region17
    $region16: #{tpu_custom_call.1} parent=1 // pred_region
      %s50 = ssub.s32 768, 768
      %51 = vsyncadd [#allocation9], %s50
      %s52 = sshll.u32 [#allocation8], 4
      %s53 = int_to_ptr.vmem [resolvable:$true] %s52
      %58 = dma.hbm_to_vmem [thread:$0]  %s3, 768, %s53, [#allocation9], 384, 384, 24
    $region17: #{tpu_custom_call.1} parent=1 // pred_fallthru
      _
    // Predicated region
    $region18: #{tpu_custom_call.1} parent=1 // pred_check
      _
    $region19: #{tpu_custom_call.1} parent=1 // pred_check_branch
      %60 = sbr.rel (0) target = $region21
    $region20: #{tpu_custom_call.1} parent=1 // pred_region
      _
    $region21: #{tpu_custom_call.1} parent=1 // pred_fallthru
      _
    // Predicated region
    $region22: #{tpu_custom_call.1} parent=1 // pred_check
      _
    $region23: #{tpu_custom_call.1} parent=1 // pred_check_branch
      %62 = sbr.rel (0) target = $region25
    $region24: #{tpu_custom_call.1} parent=1 // pred_region
      _
    $region25: #{tpu_custom_call.1} parent=1 // pred_fallthru
      _
    // Predicated region
    $region26: #{tpu_custom_call.1} parent=1 // pred_check
      _
    $region27: #{tpu_custom_call.1} parent=1 // pred_check_branch
      %64 = sbr.rel (0) target = $region29
    $region28: #{tpu_custom_call.1} parent=1 // pred_region
      %65 = dma.done [#allocation3], 32
    $region29: #{tpu_custom_call.1} parent=1 // pred_fallthru
      _
    // Predicated region
    $region30: #{tpu_custom_call.1} parent=1 // pred_check
      _
    $region31: #{tpu_custom_call.1} parent=1 // pred_check_branch
      %67 = sbr.rel (0) target = $region33
    $region32: #{tpu_custom_call.1} parent=1 // pred_region
      %68 = dma.done [#allocation6], 32
    $region33: #{tpu_custom_call.1} parent=1 // pred_fallthru
      _
    // Predicated region
    $region34: #{tpu_custom_call.1} parent=1 // pred_check
      _
    $region35: #{tpu_custom_call.1} parent=1 // pred_check_branch
      %70 = sbr.rel (0) target = $region37
    $region36: #{tpu_custom_call.1} parent=1 // pred_region
      %71 = dma.done [#allocation6], 1536
    $region37: #{tpu_custom_call.1} parent=1 // pred_fallthru
      _
    // Predicated region
    $region38: #{tpu_custom_call.1} parent=1 // pred_check
      _
    $region39: #{tpu_custom_call.1} parent=1 // pred_check_branch
      %73 = sbr.rel (0) target = $region41
    $region40: #{tpu_custom_call.1} parent=1 // pred_region
      %74 = dma.done [#allocation9], 768
    $region41: #{tpu_custom_call.1} parent=1 // pred_fallthru
      _
    %v75 = vld [vmem:[#allocation2] sm:$0x3]
    %v76 = vld [vmem:[#allocation7] sm:$0xff]
    %v77 = vld [vmem:[#allocation7 + $0x8] sm:$0xff]
    %v78 = vld [vmem:[#allocation7 + $0x10] sm:$0xff]
    %v79 = vld [vmem:[#allocation7 + $0x18] sm:$0xff]
    %v80 = vld [vmem:[#allocation7 + $0x20] sm:$0xff]
    %v81 = vld [vmem:[#allocation7 + $0x28] sm:$0xff]
    %v82 = vld [vmem:[#allocation7 + $0x30] sm:$0xff]
    %v83 = vld [vmem:[#allocation7 + $0x38] sm:$0xff]
    %v84 = vld [vmem:[#allocation7 + $0x40] sm:$0xff]
    %v85 = vld [vmem:[#allocation7 + $0x48] sm:$0xff]
    %v86 = vld [vmem:[#allocation7 + $0x50] sm:$0xff]
    %v87 = vld [vmem:[#allocation7 + $0x58] sm:$0xff]
    %v88 = vld [vmem:[%s5] sm:$0x7]
    %v90 = vlaneseq
    %v91 = vshrl.u32 %v90, 7
    %v92 = vsub.s32 0, %v91
    %v93 = vrot.slane %v88, %v92
    %v94 = vlaneseq
    %v95 = vshrl.u32 %v94, 7
    %v96 = vsub.s32 1, %v95
    %v97 = vrot.slane %v88, %v96
    %v98 = vlaneseq
    %v99 = vshrl.u32 %v98, 7
    %v100 = vsub.s32 2, %v99
    %v101 = vrot.slane %v88, %v100
    %vm105 = vcmask 261120
    %v107 = vsel %vm105, %v75, 0
    %109 = vmatprep.subr.mxu0 %v77
    %110 = vmatpush1.msra.mxu0 %v76
    %111 = vmatprep.subr.mxu0 %v80
    %112 = vmatpush1.msra.mxu0 %v79
    %113 = vmatprep.subr.mxu0 %v83
    %114 = vmatpush1.msra.mxu0 %v82
    %115 = vmatprep.subr.mxu0 %v86
    %116 = vmatpush1.msra.mxu0 %v85
    %117 = vmatprep.subr.mxu0 0.0
    %118 = vmatpush1.msra.mxu0 0.0
    %119 = vmatprep.subr.mxu0 0.0
    %120 = vmatpush1.msra.mxu0 0.0
    %121 = vmatprep.subr.mxu0 0.0
    %122 = vmatpush1.msra.mxu0 0.0
    %123 = vmatprep.subr.mxu0 0.0
    %124 = vmatpush1.msra.mxu0 0.0
    %125 = vmatprep.subr.mxu0 0.0
    %126 = vmatpush1.msra.mxu0 0.0
    %127 = vmatprep.subr.mxu0 0.0
    %128 = vmatpush1.msra.mxu0 0.0
    %129 = vmatprep.subr.mxu0 0.0
    %130 = vmatpush1.msra.mxu0 0.0
    %131 = vmatprep.subr.mxu0 0.0
    %132 = vmatpush1.msra.mxu0 0.0
    %133 = vmatprep.subr.mxu0 0.0
    %134 = vmatpush1.msra.mxu0 0.0
    %135 = vmatprep.subr.mxu0 0.0
    %136 = vmatpush1.msra.mxu0 0.0
    %137 = vmatprep.subr.mxu0 0.0
    %138 = vmatpush1.msra.mxu0 0.0
    %139 = vmatprep.subr.mxu0 0.0
    %140 = vmatpush1.msra.mxu0 0.0
    %141 = vmatprep.subr.mxu0 0.0
    %142 = vmatpush1.msra.mxu0 0.0
    %143 = vmatprep.subr.mxu0 0.0
    %144 = vmatpush1.msra.mxu0 0.0
    %145 = vmatprep.subr.mxu0 0.0
    %146 = vmatpush1.msra.mxu0 0.0
    %147 = vmatprep.subr.mxu0 0.0
    %148 = vmatpush1.msra.mxu0 0.0
    %149 = vmatprep.subr.mxu0 0.0
    %150 = vmatpush1.msra.mxu0 0.0
    %151 = vmatprep.subr.mxu0 0.0
    %152 = vmatpush1.msra.mxu0 0.0
    %153 = vmatprep.subr.mxu0 0.0
    %154 = vmatpush1.msra.mxu0 0.0
    %155 = vmatprep.subr.mxu0 0.0
    %156 = vmatpush1.msra.mxu0 0.0
    %157 = vmatprep.subr.mxu0 0.0
    %158 = vmatpush1.msra.mxu0 0.0
    %159 = vmatprep.subr.mxu0 0.0
    %160 = vmatpush1.msra.mxu0 0.0
    %161 = vmatprep.subr.mxu0 0.0
    %162 = vmatpush1.msra.mxu0 0.0
    %163 = vmatprep.subr.mxu0 0.0
    %164 = vmatpush1.msra.mxu0 0.0
    %165 = vmatprep.subr.mxu0 0.0
    %166 = vmatpush1.msra.mxu0 0.0
    %167 = vmatprep.subr.mxu0 0.0
    %168 = vmatpush1.msra.mxu0 0.0
    %169 = vmatprep.subr.mxu0 0.0
    %170 = vmatpush1.msra.mxu0 0.0
    %171 = vmatprep.subr.mxu0 0.0
    %172 = vmatpush1.msra.mxu0 0.0
    %173 = vmatprep.mubr.f32.mxu0 0.0
    %174 = vmatmul.mubr.f32.gmra.mrb[0].mxu0 %v107
    %v175 = vpop.f32.mrb[0].mxu0
    %v176 = vadd.f32 %v93, %v175
    %v177 = vpop.f32.mrb[0].mxu0
    %v178 = vadd.f32 %v97, %v177
    %179 = vdwg.mxu0
    %180 = vmatprep.subr.mxu0 0.0
    %181 = vmatpush1.msra.mxu0 %v78
    %182 = vmatprep.subr.mxu0 0.0
    %183 = vmatpush1.msra.mxu0 %v81
    %184 = vmatprep.subr.mxu0 0.0
    %185 = vmatpush1.msra.mxu0 %v84
    %186 = vmatprep.subr.mxu0 0.0
    %187 = vmatpush1.msra.mxu0 %v87
    %188 = vmatprep.subr.mxu0 0.0
    %189 = vmatpush1.msra.mxu0 0.0
    %190 = vmatprep.subr.mxu0 0.0
    %191 = vmatpush1.msra.mxu0 0.0
    %192 = vmatprep.subr.mxu0 0.0
    %193 = vmatpush1.msra.mxu0 0.0
    %194 = vmatprep.subr.mxu0 0.0
    %195 = vmatpush1.msra.mxu0 0.0
    %196 = vmatprep.subr.mxu0 0.0
    %197 = vmatpush1.msra.mxu0 0.0
    %198 = vmatprep.subr.mxu0 0.0
    %199 = vmatpush1.msra.mxu0 0.0
    %200 = vmatprep.subr.mxu0 0.0
    %201 = vmatpush1.msra.mxu0 0.0
    %202 = vmatprep.subr.mxu0 0.0
    %203 = vmatpush1.msra.mxu0 0.0
    %204 = vmatprep.subr.mxu0 0.0
    %205 = vmatpush1.msra.mxu0 0.0
    %206 = vmatprep.subr.mxu0 0.0
    %207 = vmatpush1.msra.mxu0 0.0
    %208 = vmatprep.subr.mxu0 0.0
    %209 = vmatpush1.msra.mxu0 0.0
    %210 = vmatprep.subr.mxu0 0.0
    %211 = vmatpush1.msra.mxu0 0.0
    %212 = vmatprep.subr.mxu0 0.0
    %213 = vmatpush1.msra.mxu0 0.0
    %214 = vmatprep.subr.mxu0 0.0
    %215 = vmatpush1.msra.mxu0 0.0
    %216 = vmatprep.subr.mxu0 0.0
    %217 = vmatpush1.msra.mxu0 0.0
    %218 = vmatprep.subr.mxu0 0.0
    %219 = vmatpush1.msra.mxu0 0.0
    %220 = vmatprep.subr.mxu0 0.0
    %221 = vmatpush1.msra.mxu0 0.0
    %222 = vmatprep.subr.mxu0 0.0
    %223 = vmatpush1.msra.mxu0 0.0
    %224 = vmatprep.subr.mxu0 0.0
    %225 = vmatpush1.msra.mxu0 0.0
    %226 = vmatprep.subr.mxu0 0.0
    %227 = vmatpush1.msra.mxu0 0.0
    %228 = vmatprep.subr.mxu0 0.0
    %229 = vmatpush1.msra.mxu0 0.0
    %230 = vmatprep.subr.mxu0 0.0
    %231 = vmatpush1.msra.mxu0 0.0
    %232 = vmatprep.subr.mxu0 0.0
    %233 = vmatpush1.msra.mxu0 0.0
    %234 = vmatprep.subr.mxu0 0.0
    %235 = vmatpush1.msra.mxu0 0.0
    %236 = vmatprep.subr.mxu0 0.0
    %237 = vmatpush1.msra.mxu0 0.0
    %238 = vmatprep.subr.mxu0 0.0
    %239 = vmatpush1.msra.mxu0 0.0
    %240 = vmatprep.subr.mxu0 0.0
    %241 = vmatpush1.msra.mxu0 0.0
    %242 = vmatprep.subr.mxu0 0.0
    %243 = vmatpush1.msra.mxu0 0.0
    %244 = vmatprep.mubr.f32.mxu0 0.0
    %245 = vmatmul.mubr.f32.gmra.mrb[0].mxu0 %v107
    %v246 = vpop.f32.mrb[0].mxu0
    %v247 = vadd.f32 %v101, %v246
    %v248 = vpop.f32.mrb[0].mxu0
    %249 = vdwg.mxu0
    %v250 = vld [vmem:[#allocation5] sm:$0x3]
    %v251 = vld [vmem:[#allocation8] sm:$0xff]
    %v252 = vld [vmem:[#allocation8 + $0x8] sm:$0xff]
    %v253 = vld [vmem:[#allocation8 + $0x10] sm:$0xff]
    %v254 = vld [vmem:[#allocation8 + $0x18] sm:$0xff]
    %v255 = vld [vmem:[#allocation8 + $0x20] sm:$0xff]
    %v256 = vld [vmem:[#allocation8 + $0x28] sm:$0xff]
    %v257 = vld [vmem:[%s4] sm:$0x7]
    %v259 = vlaneseq
    %v260 = vshrl.u32 %v259, 7
    %v261 = vsub.s32 0, %v260
    %v262 = vrot.slane %v257, %v261
    %v263 = vlaneseq
    %v264 = vshrl.u32 %v263, 7
    %v265 = vsub.s32 1, %v264
    %v266 = vrot.slane %v257, %v265
    %v267 = vlaneseq
    %v268 = vshrl.u32 %v267, 7
    %v269 = vsub.s32 2, %v268
    %v270 = vrot.slane %v257, %v269
    %vm274 = vcmask 130048
    %v276 = vsel %vm274, %v250, 0
    %278 = vmatprep.subr.mxu0 %v252
    %279 = vmatpush1.msra.mxu0 %v251
    %280 = vmatprep.subr.mxu0 %v255
    %281 = vmatpush1.msra.mxu0 %v254
    %282 = vmatprep.subr.mxu0 0.0
    %283 = vmatpush1.msra.mxu0 0.0
    %284 = vmatprep.subr.mxu0 0.0
    %285 = vmatpush1.msra.mxu0 0.0
    %286 = vmatprep.subr.mxu0 0.0
    %287 = vmatpush1.msra.mxu0 0.0
    %288 = vmatprep.subr.mxu0 0.0
    %289 = vmatpush1.msra.mxu0 0.0
    %290 = vmatprep.subr.mxu0 0.0
    %291 = vmatpush1.msra.mxu0 0.0
    %292 = vmatprep.subr.mxu0 0.0
    %293 = vmatpush1.msra.mxu0 0.0
    %294 = vmatprep.subr.mxu0 0.0
    %295 = vmatpush1.msra.mxu0 0.0
    %296 = vmatprep.subr.mxu0 0.0
    %297 = vmatpush1.msra.mxu0 0.0
    %298 = vmatprep.subr.mxu0 0.0
    %299 = vmatpush1.msra.mxu0 0.0
    %300 = vmatprep.subr.mxu0 0.0
    %301 = vmatpush1.msra.mxu0 0.0
    %302 = vmatprep.subr.mxu0 0.0
    %303 = vmatpush1.msra.mxu0 0.0
    %304 = vmatprep.subr.mxu0 0.0
    %305 = vmatpush1.msra.mxu0 0.0
    %306 = vmatprep.subr.mxu0 0.0
    %307 = vmatpush1.msra.mxu0 0.0
    %308 = vmatprep.subr.mxu0 0.0
    %309 = vmatpush1.msra.mxu0 0.0
    %310 = vmatprep.subr.mxu0 0.0
    %311 = vmatpush1.msra.mxu0 0.0
    %312 = vmatprep.subr.mxu0 0.0
    %313 = vmatpush1.msra.mxu0 0.0
    %314 = vmatprep.subr.mxu0 0.0
    %315 = vmatpush1.msra.mxu0 0.0
    %316 = vmatprep.subr.mxu0 0.0
    %317 = vmatpush1.msra.mxu0 0.0
    %318 = vmatprep.subr.mxu0 0.0
    %319 = vmatpush1.msra.mxu0 0.0
    %320 = vmatprep.subr.mxu0 0.0
    %321 = vmatpush1.msra.mxu0 0.0
    %322 = vmatprep.subr.mxu0 0.0
    %323 = vmatpush1.msra.mxu0 0.0
    %324 = vmatprep.subr.mxu0 0.0
    %325 = vmatpush1.msra.mxu0 0.0
    %326 = vmatprep.subr.mxu0 0.0
    %327 = vmatpush1.msra.mxu0 0.0
    %328 = vmatprep.subr.mxu0 0.0
    %329 = vmatpush1.msra.mxu0 0.0
    %330 = vmatprep.subr.mxu0 0.0
    %331 = vmatpush1.msra.mxu0 0.0
    %332 = vmatprep.subr.mxu0 0.0
    %333 = vmatpush1.msra.mxu0 0.0
    %334 = vmatprep.subr.mxu0 0.0
    %335 = vmatpush1.msra.mxu0 0.0
    %336 = vmatprep.subr.mxu0 0.0
    %337 = vmatpush1.msra.mxu0 0.0
    %338 = vmatprep.subr.mxu0 0.0
    %339 = vmatpush1.msra.mxu0 0.0
    %340 = vmatprep.subr.mxu0 0.0
    %341 = vmatpush1.msra.mxu0 0.0
    %342 = vmatprep.mubr.f32.mxu0 0.0
    %343 = vmatmul.mubr.f32.gmra.mrb[0].mxu0 %v276
    %v344 = vpop.f32.mrb[0].mxu0
    %v345 = vadd.f32 %v262, %v344
    %v346 = vpop.f32.mrb[0].mxu0
    %v347 = vadd.f32 %v266, %v346
    %348 = vdwg.mxu0
    %349 = vmatprep.subr.mxu0 0.0
    %350 = vmatpush1.msra.mxu0 %v253
    %351 = vmatprep.subr.mxu0 0.0
    %352 = vmatpush1.msra.mxu0 %v256
    %353 = vmatprep.subr.mxu0 0.0
    %354 = vmatpush1.msra.mxu0 0.0
    %355 = vmatprep.subr.mxu0 0.0
    %356 = vmatpush1.msra.mxu0 0.0
    %357 = vmatprep.subr.mxu0 0.0
    %358 = vmatpush1.msra.mxu0 0.0
    %359 = vmatprep.subr.mxu0 0.0
    %360 = vmatpush1.msra.mxu0 0.0
    %361 = vmatprep.subr.mxu0 0.0
    %362 = vmatpush1.msra.mxu0 0.0
    %363 = vmatprep.subr.mxu0 0.0
    %364 = vmatpush1.msra.mxu0 0.0
    %365 = vmatprep.subr.mxu0 0.0
    %366 = vmatpush1.msra.mxu0 0.0
    %367 = vmatprep.subr.mxu0 0.0
    %368 = vmatpush1.msra.mxu0 0.0
    %369 = vmatprep.subr.mxu0 0.0
    %370 = vmatpush1.msra.mxu0 0.0
    %371 = vmatprep.subr.mxu0 0.0
    %372 = vmatpush1.msra.mxu0 0.0
    %373 = vmatprep.subr.mxu0 0.0
    %374 = vmatpush1.msra.mxu0 0.0
    %375 = vmatprep.subr.mxu0 0.0
    %376 = vmatpush1.msra.mxu0 0.0
    %377 = vmatprep.subr.mxu0 0.0
    %378 = vmatpush1.msra.mxu0 0.0
    %379 = vmatprep.subr.mxu0 0.0
    %380 = vmatpush1.msra.mxu0 0.0
    %381 = vmatprep.subr.mxu0 0.0
    %382 = vmatpush1.msra.mxu0 0.0
    %383 = vmatprep.subr.mxu0 0.0
    %384 = vmatpush1.msra.mxu0 0.0
    %385 = vmatprep.subr.mxu0 0.0
    %386 = vmatpush1.msra.mxu0 0.0
    %387 = vmatprep.subr.mxu0 0.0
    %388 = vmatpush1.msra.mxu0 0.0
    %389 = vmatprep.subr.mxu0 0.0
    %390 = vmatpush1.msra.mxu0 0.0
    %391 = vmatprep.subr.mxu0 0.0
    %392 = vmatpush1.msra.mxu0 0.0
    %393 = vmatprep.subr.mxu0 0.0
    %394 = vmatpush1.msra.mxu0 0.0
    %395 = vmatprep.subr.mxu0 0.0
    %396 = vmatpush1.msra.mxu0 0.0
    %397 = vmatprep.subr.mxu0 0.0
    %398 = vmatpush1.msra.mxu0 0.0
    %399 = vmatprep.subr.mxu0 0.0
    %400 = vmatpush1.msra.mxu0 0.0
    %401 = vmatprep.subr.mxu0 0.0
    %402 = vmatpush1.msra.mxu0 0.0
    %403 = vmatprep.subr.mxu0 0.0
    %404 = vmatpush1.msra.mxu0 0.0
    %405 = vmatprep.subr.mxu0 0.0
    %406 = vmatpush1.msra.mxu0 0.0
    %407 = vmatprep.subr.mxu0 0.0
    %408 = vmatpush1.msra.mxu0 0.0
    %409 = vmatprep.subr.mxu0 0.0
    %410 = vmatpush1.msra.mxu0 0.0
    %411 = vmatprep.subr.mxu0 0.0
    %412 = vmatpush1.msra.mxu0 0.0
    %413 = vmatprep.mubr.f32.mxu0 0.0
    %414 = vmatmul.mubr.f32.gmra.mrb[0].mxu0 %v276
    %v415 = vpop.f32.mrb[0].mxu0
    %v416 = vadd.f32 %v270, %v415
    %v417 = vpop.f32.mrb[0].mxu0
    %418 = vdwg.mxu0
    %v419 = vadd.f32 %v345, %v176
    %v420 = vadd.f32 %v347, %v178
    %v421 = vxor.u32 %v419, 2147483648
    %v422 = vxor.u32 %v420, 2147483648
    %v423 = vmul.f32 %v421, 1.442695
    %v424 = vpow.pop %v423
    %v425 = vmul.f32 %v422, 1.442695
    %v426 = vpow.pop %v425
    %v427 = vadd.f32 %v424, 1.0
    %v428 = vadd.f32 %v426, 1.0
    %v429 = vrcp.pop %v427
    %v430 = vmul.f32 1.0, %v429
    %v431 = vrcp.pop %v428
    %v432 = vmul.f32 1.0, %v431
    %v433 = vmul.f32 %v430, %v247
    %v434 = vadd.f32 %v416, %v433
    %v435 = vtanh.pop %v434
    %v436 = vsub.f32 %v75, %v435
    %v437 = vmul.f32 %v432, %v436
    %v438 = vadd.f32 %v435, %v437
    %vm439 = vcmask 254976
    %440 = vst.msk [vmem:[#allocation10] sm:$0x3] %vm439, %v438
    // Predicated region
    $region42: #{tpu_custom_call.1} parent=1 // pred_check
      _
    $region43: #{tpu_custom_call.1} parent=1 // pred_check_branch
      %442 = sbr.rel (0) target = $region45
    $region44: #{tpu_custom_call.1} parent=1 // pred_region
      %s444 = ssub.s32 32, 32
      %445 = vsyncadd [#allocation4], %s444
      %s447 = sshll.u32 [#allocation10], 4
      %s448 = int_to_ptr.vmem [resolvable:$true] %s447
      %450 = dma.vmem_to_hbm [thread:$0]  %s448, 32, %s6, [#allocation4]
    $region45: #{tpu_custom_call.1} parent=1 // pred_fallthru
      _
    // Predicated region
    $region46: #{tpu_custom_call.1} parent=1 // pred_check
      _
    $region47: #{tpu_custom_call.1} parent=1 // pred_check_branch
      %452 = sbr.rel (0) target = $region49
    $region48: #{tpu_custom_call.1} parent=1 // pred_region
      %453 = dma.done [#allocation4], 32
    $region49: #{tpu_custom_call.1} parent=1 // pred_fallthru
      _
    %454 = vsyncpa [#allocation3], 1
    %455 = vsyncpa [#allocation6], 1
    %456 = vsyncpa [#allocation9], 1
    %457 = vsyncpa [#allocation4], 1

</llo_original>
